<compile_context>
chip_gen: v5e
topology: v5e:2x2
jax: 0.10.0
libtpu: 0.0.40
codegen_flags: <defaults>
</compile_context>

<pallas_src>
import jax
import jax.numpy as jnp
from jax import lax
from jax.experimental import pallas as pl
from jax.experimental.pallas import tpu as pltpu


def _round_up(x, m):
    return ((x + m - 1) // m) * m


# ---------------------------------------------------------------------------
# Kernel 1: 1x1-conv backbone stub (per-pixel matmul + bias + ReLU), bf16 output
# ---------------------------------------------------------------------------
def _conv1x1_kernel(x_ref, w_ref, b_ref, o_ref):
    x = x_ref[...].astype(w_ref.dtype)                                   # bf16 activations
    acc = jnp.dot(x, w_ref[...], preferred_element_type=jnp.float32)     # MXU, f32 acc
    acc = acc + b_ref[...]                                               # f32 epilogue
    o_ref[...] = jnp.maximum(acc, 0.0).astype(o_ref.dtype)               # cast only on store


def pallas_conv1x1(x, w, b2d, tile_m=512):
    """x: [M, K] f32, w: [K, Np] bf16 (lane-padded Np%128==0), b2d: [1, Np] f32.
    Returns [M, Np] bf16 (halved HBM writeback vs f32)."""
    M, K = x.shape
    _, N = w.shape
    if M < tile_m:
        tile_m = max(16, _round_up(M, 16))          # bf16 sublane packing -> multiple of 16
    Mp = _round_up(M, tile_m)
    if Mp != M:
        x = jnp.pad(x, ((0, Mp - M), (0, 0)))
    out = pl.pallas_call(
        _conv1x1_kernel,
        out_shape=jax.ShapeDtypeStruct((Mp, N), jnp.bfloat16),
        grid_spec=pltpu.PrefetchScalarGridSpec(
            num_scalar_prefetch=0,
            grid=(Mp // tile_m,),
            in_specs=[
                pl.BlockSpec((tile_m, K), lambda i: (i, 0)),
                pl.BlockSpec((K, N), lambda i: (0, 0)),
                pl.BlockSpec((1, N), lambda i: (0, 0)),
            ],
            out_specs=pl.BlockSpec((tile_m, N), lambda i: (i, 0)),
        ),
        compiler_params=pltpu.CompilerParams(dimension_semantics=("parallel",)),
    )(x, w, b2d)
    return out[:M]


# ---------------------------------------------------------------------------
# Kernel 2: fused FRTwoMLPHead (fc6 -> ReLU -> fc7 -> ReLU) + bbox regression
#           M-tiled "parallel" grid, weights resident (constant index_maps)
# ---------------------------------------------------------------------------
def _mlp_bbox_kernel(x_ref, w6_ref, b6_ref, w7_ref, b7_ref, wb_ref, bb_ref, o_ref):
    x = x_ref[...]                                                       # bf16 [tm, K]
    h6 = jnp.dot(x, w6_ref[...], preferred_element_type=jnp.float32) + b6_ref[...]
    h6 = jnp.maximum(h6, 0.0).astype(w7_ref.dtype)
    h7 = jnp.dot(h6, w7_ref[...], preferred_element_type=jnp.float32) + b7_ref[...]
    h7 = jnp.maximum(h7, 0.0).astype(wb_ref.dtype)
    o_ref[...] = jnp.dot(h7, wb_ref[...], preferred_element_type=jnp.float32) + bb_ref[...]


def pallas_mlp_bbox(flat, w6, b6, w7, b7, wb, bb, tile_m=128):
    """flat: [M, K] bf16; weights bf16, biases [1, N] f32 (bbox N lane-padded)."""
    M, K = flat.shape
    if M < tile_m:
        tile_m = max(16, _round_up(M, 16))          # bf16 sublane packing -> multiple of 16
    Mp = _round_up(M, tile_m)
    if Mp != M:
        flat = jnp.pad(flat, ((0, Mp - M), (0, 0)))
    rep = w6.shape[1]
    nb = wb.shape[1]
    out = pl.pallas_call(
        _mlp_bbox_kernel,
        out_shape=jax.ShapeDtypeStruct((Mp, nb), jnp.float32),
        grid_spec=pltpu.PrefetchScalarGridSpec(
            num_scalar_prefetch=0,
            grid=(Mp // tile_m,),
            in_specs=[
                pl.BlockSpec((tile_m, K), lambda i: (i, 0)),
                pl.BlockSpec((K, rep), lambda i: (0, 0)),
                pl.BlockSpec((1, rep), lambda i: (0, 0)),
                pl.BlockSpec((rep, rep), lambda i: (0, 0)),
                pl.BlockSpec((1, rep), lambda i: (0, 0)),
                pl.BlockSpec((rep, nb), lambda i: (0, 0)),
                pl.BlockSpec((1, nb), lambda i: (0, 0)),
            ],
            out_specs=pl.BlockSpec((tile_m, nb), lambda i: (i, 0)),
        ),
        compiler_params=pltpu.CompilerParams(dimension_semantics=("parallel",)),
    )(flat, w6, b6, w7, b7, wb, bb)
    return out[:M]


# ---------------------------------------------------------------------------
# Kernel 3: reconstruction-distance classification logits (fully fused)
#   q (bf16, unnormalized) -> L2 normalize (rsqrt on EUP)
#   -> p = q @ A_stacked (bf16 MXU) -> pp = p*p
#   -> t = G_indicator @ pp              (per-RoI sum over pixels; reassociated)
#   -> logits = t @ R_scaled             (class-sum + mean + negation + `scale`, f32)
# ---------------------------------------------------------------------------
def _recon_logits_kernel(q_ref, a_ref, g_ref, r_ref, o_ref):
    q = q_ref[...].astype(jnp.float32)                                   # [rows, d_pad]
    sumsq = jnp.sum(q * q, axis=-1, keepdims=True)
    qn = q * lax.rsqrt(jnp.maximum(sumsq, 1e-12))                        # fused L2 normalize
    p = jnp.dot(qn.astype(a_ref.dtype), a_ref[...],
                preferred_element_type=jnp.float32)                      # [rows, NA] bf16 MXU
    pp = (p * p).astype(g_ref.dtype)
    t = jnp.dot(g_ref[...], pp, preferred_element_type=jnp.float32)      # [rois, NA]
    o_ref[...] = jnp.dot(t, r_ref[...], preferred_element_type=jnp.float32)  # [rois, 128]


def pallas_recon_logits(q, a_stack, g_mat, r_mat, *, resolution, rois_per_tile=32):
    """q: [n_roi*res, d_pad] bf16 (unnormalized). Returns [n_roi_pad, 128] f32 logits."""
    d = q.shape[1]
    n_roi = q.shape[0] // resolution
    n_tiles = max(1, _round_up(n_roi, rois_per_tile) // rois_per_tile)
    n_roi_pad = n_tiles * rois_per_tile
    Mp = n_roi_pad * resolution
    if Mp != q.shape[0]:
        q = jnp.pad(q, ((0, Mp - q.shape[0]), (0, 0)))
    rows = rois_per_tile * resolution
    na = a_stack.shape[1]
    wp = r_mat.shape[1]
    out = pl.pallas_call(
        _recon_logits_kernel,
        out_shape=jax.ShapeDtypeStruct((n_roi_pad, wp), jnp.float32),
        grid_spec=pltpu.PrefetchScalarGridSpec(
            num_scalar_prefetch=0,
            grid=(n_tiles,),
            in_specs=[
                pl.BlockSpec((rows, d), lambda i: (i, 0)),
                pl.BlockSpec((d, na), lambda i: (0, 0)),
                pl.BlockSpec((rois_per_tile, rows), lambda i: (0, 0)),
                pl.BlockSpec((na, wp), lambda i: (0, 0)),
            ],
            out_specs=pl.BlockSpec((rois_per_tile, wp), lambda i: (i, 0)),
        ),
        compiler_params=pltpu.CompilerParams(dimension_semantics=("parallel",)),
    )(q, a_stack, g_mat, r_mat)
    return out


# ---------------------------------------------------------------------------
# FROD wrapper (parameters + forward)
# ---------------------------------------------------------------------------
class FRODPallas:
    def __init__(self, *, way, shot, representation_size, roi_size, channels,
                 scale, c_in=3, num_classes=None, key=None):
        self.way = way
        self.shot = shot
        self.roi_size = roi_size
        self.resolution = roi_size * roi_size
        self.channels = channels
        self.scale = float(scale)
        self.num_classes = num_classes if num_classes is not None else way + 1
        # same condition as the PyTorch module
        self.Woodubry = self.channels < way * self.resolution
        self.rois_per_tile = 32   # rows = 32*res per grid step: real per-step MXU work,
                                  # >1 "parallel" steps for realistic RoI counts (v7x 2 TCs)

        key = jax.random.PRNGKey(0) if key is None else key
        ks = jax.random.split(key, 8)
        d = channels
        rep = representation_size
        res = self.resolution

        # --- backbone stub: 1x1 conv c_in -> channels, lane-padded to 128 outputs,
        #     padding kept end-to-end (no post-conv slice/copy) ---
        d_pad = _round_up(d, 128)
        self.d_pad = d_pad
        w_bb = 0.05 * jax.random.normal(ks[0], (c_in, d), jnp.float32)
        self.w_bb = jnp.zeros((c_in, d_pad), jnp.bfloat16).at[:, :d].set(w_bb.astype(jnp.bfloat16))
        self.b_bb = jnp.zeros((1, d_pad), jnp.float32)

        # --- FRTwoMLPHead: fc6 rows permuted once from CHW-flatten order to the
        #     HWC-with-lane-padding flatten order the bf16 feature map uses, so the RoI
        #     features are flattened directly with no per-forward transpose or slice ---
        w_fc6_chw = 0.02 * jax.random.normal(ks[1], (d * res, rep), jnp.float32)
        pix = jnp.arange(res)
        cc = jnp.arange(d)
        rows_hwc = (pix[:, None] * d_pad + cc[None, :]).reshape(-1)        # dst rows
        rows_chw = (cc[None, :] * res + pix[:, None]).reshape(-1)          # src rows
        w_fc6 = jnp.zeros((res * d_pad, rep), jnp.float32).at[rows_hwc].set(w_fc6_chw[rows_chw])
        self.w_fc6 = w_fc6.astype(jnp.bfloat16)
        self.b_fc6 = jnp.zeros((1, rep), jnp.float32)
        self.w_fc7 = (0.02 * jax.random.normal(ks[2], (rep, rep), jnp.float32)).astype(jnp.bfloat16)
        self.b_fc7 = jnp.zeros((1, rep), jnp.float32)

        # --- FRPredictor bbox regression head, lane-padded to 128 outputs ---
        self.nbbox = self.num_classes * 4
        nb_pad = _round_up(self.nbbox, 128)
        w_bbox = 0.02 * jax.random.normal(ks[3], (rep, self.nbbox), jnp.float32)
        self.w_bbox = jnp.zeros((rep, nb_pad), jnp.bfloat16).at[:, :self.nbbox].set(
            w_bbox.astype(jnp.bfloat16))
        self.b_bbox = jnp.zeros((1, nb_pad), jnp.float32)

        # --- FRN-style ridge-regression temperatures (alpha = beta = 0 at init) ---
        r = shot * self.resolution
        self.lam = (r / d) * 1.0 + 1e-6   # reg * exp(alpha)
        self.rho = 1.0                     # exp(beta)

        # --- static helper matrices for the fused recon-logits kernel ---
        assert way <= 128, "class-logit lane padding assumes way <= 128"
        self.na = _round_up(way * d, 128)      # stacked operator width (128-aligned)
        self.wp = 128                          # lane-dense logits output width
        # R: block-diagonal "sum over d per class", scale folded here in f32
        # (mean over resolution, negation, `scale`): exact, independent of bf16 G.
        rows_idx = jnp.arange(way * d)
        self.r_mat = jnp.zeros((self.na, self.wp), jnp.float32).at[
            rows_idx, rows_idx // d].set(-self.scale / self.resolution)
        # G: exact 0/1 indicator mapping pixel-rows -> their RoI (bf16, exact values)
        rows = self.rois_per_tile * self.resolution
        roi_of_row = jnp.arange(rows) // self.resolution
        self.g_mat = (jnp.arange(self.rois_per_tile)[:, None] == roi_of_row[None, :]
                      ).astype(jnp.bfloat16)

    # ---- backbone stub: 1x1 conv + ReLU (Pallas matmul, bf16 lane-padded output) ----
    def _backbone(self, images_nchw):
        n, c, h, w = images_nchw.shape
        x = jnp.transpose(images_nchw, (0, 2, 3, 1)).reshape(n * h * w, c)   # NHWC pixels
        feat = pallas_conv1x1(x, self.w_bb, self.b_bb)                        # [M, d_pad] bf16
        return feat.reshape(n, h, w, self.d_pad)                              # NHWC features

    # ---- SupportBranch ----
    def _support_branch(self, support_images):
        feats = self._backbone(support_images)                   # [way*shot, r, r, d_pad]
        s = feats.reshape(self.way, self.shot * self.resolution, self.d_pad)
        s = s[..., :self.channels].astype(jnp.float32)            # tiny, plain JAX
        s = s / (jnp.linalg.norm(s, axis=-1, keepdims=True) + 1e-6)
        return s                                                  # [way, shot*res, d]

    # ---- FRPredictor classification: ridge-regression reconstruction ----
    def _recon_logits(self, q_feats_nhwc):
        n_roi = q_feats_nhwc.shape[0]
        d = self.channels
        q = q_feats_nhwc.reshape(n_roi * self.resolution, self.d_pad)  # per-pixel vectors, bf16

        s = self.support  # [way, shot*res, d]
        eye = jnp.eye(d, dtype=jnp.float32)
        if self.Woodubry:
            # hat = (S^T S + lam I)^-1 (S^T S)      (invert d x d)
            sts = jnp.einsum('wrd,wre->wde', s, s)
            # TODO(synk): batched matrix inverse stays in plain JAX (no Pallas primitive)
            hat = jnp.linalg.inv(sts + self.lam * eye[None]) @ sts
        else:
            # hat = S^T (S S^T + lam I)^-1 S        (invert r x r)
            r = s.shape[1]
            sst = jnp.einsum('wrd,wsd->wrs', s, s)
            eye_r = jnp.eye(r, dtype=jnp.float32)[None]
            hat = jnp.einsum('wrd,wrs,wse->wde', s, jnp.linalg.inv(sst + self.lam * eye_r), s)

        # fold rho and the identity subtraction into the operator: diff = q @ (rho*hat - I)
        a = self.rho * hat - eye[None]                            # [way, d, d]
        a_stack = jnp.transpose(a, (1, 0, 2)).reshape(d, self.way * d)
        a_stack = jnp.pad(a_stack,
                          ((0, self.d_pad - d), (0, self.na - self.way * d)))
        a_stack = a_stack.astype(jnp.bfloat16)                    # host-cast once per episode

        logits = pallas_recon_logits(q, a_stack, self.g_mat, self.r_mat,
                                     resolution=self.resolution,
                                     rois_per_tile=self.rois_per_tile)
        return logits[:n_roi, :self.way]                          # [n_roi, way]

    # ---- forward (mirrors FROD.forward data flow) ----
    def forward(self, support_images, query_images, targets=None):
        # s = self.support_branch(support_list); self.box_predictor.support = s
        self.support = self._support_branch(support_images)

        # fast_rcnn.forward(query_images, targets):
        # TODO(synk): RPN / NMS / RoIAlign skipped; each query image == one full-image RoI.
        roi_feats = self._backbone(query_images)                  # [n_roi, r, r, d_pad] bf16

        # FRTwoMLPHead + bbox head fused: flatten directly in padded-HWC order (w_fc6 rows
        # were permuted at init), fc6+ReLU -> fc7+ReLU -> bbox, all in one pallas_call.
        n_roi = roi_feats.shape[0]
        flat = roi_feats.reshape(n_roi, self.resolution * self.d_pad)
        bbox = pallas_mlp_bbox(flat, self.w_fc6, self.b_fc6,
                               self.w_fc7, self.b_fc7,
                               self.w_bbox, self.b_bbox)
        bbox_deltas = bbox[:, :self.nbbox]

        class_logits = self._recon_logits(roi_feats)

        return {"class_logits": class_logits, "bbox_deltas": bbox_deltas}


# ---------------------------------------------------------------------------
if __name__ == "__main__":
    way, shot = 2, 2
    roi_size = 8                       # resolution = 64
    channels = 32
    representation_size = 128
    c_in = 3
    n_query = 4

    key = jax.random.PRNGKey(0)
    k_sup, k_qry, k_par = jax.random.split(key, 3)
    support_images = jax.random.normal(k_sup, (way * shot, c_in, roi_size, roi_size), jnp.float32)
    query_images = jax.random.normal(k_qry, (n_query, c_in, roi_size, roi_size), jnp.float32)

    model = FRODPallas(way=way, shot=shot, representation_size=representation_size,
                       roi_size=roi_size, channels=channels, scale=10.0,
                       c_in=c_in, num_classes=way + 1, key=k_par)

    out = model.forward(support_images, query_images, targets=None)
    jax.block_until_ready(out)

    assert out["class_logits"].shape == (n_query, way)
    assert out["bbox_deltas"].shape == (n_query, (way + 1) * 4)
    assert bool(jnp.all(jnp.isfinite(out["class_logits"])))
    assert bool(jnp.all(jnp.isfinite(out["bbox_deltas"])))
    print("KERNEL_OK")
</pallas_src>

<mosaic_0001>
module attributes {stable_mosaic.version = 11 : i64} {
  func.func @_conv1x1_kernel(%arg0: i32, %arg1: memref<256x3xf32, #tpu.memory_space<vmem>>, %arg2: memref<3x128xbf16, #tpu.memory_space<vmem>>, %arg3: memref<1x128xf32, #tpu.memory_space<vmem>>, %arg4: memref<256x128xbf16, #tpu.memory_space<vmem>>) attributes {dimension_semantics = [#tpu.dimension_semantics<parallel>], iteration_bounds = array<i64: 1>, scalar_prefetch = 0 : i64, scratch_operands = 0 : i64, tpu.core_type = #tpu.core_type<tc>, window_params = [{transform_indices = @transform_0, window_bounds = array<i64: 256, 3>}, {pipeline_mode = #tpu.pipeline_mode<synchronous>, transform_indices = @transform_1, window_bounds = array<i64: 3, 128>}, {pipeline_mode = #tpu.pipeline_mode<synchronous>, transform_indices = @transform_2, window_bounds = array<i64: 1, 128>}, {transform_indices = @transform_3, window_bounds = array<i64: 256, 128>}]} {
    %c0 = arith.constant 0 : index
    %c0_0 = arith.constant 0 : index
    %0 = vector.load %arg1[%c0, %c0_0] : memref<256x3xf32, #tpu.memory_space<vmem>>, vector<256x3xf32>
    %1 = arith.truncf %0 : vector<256x3xf32> to vector<256x3xbf16>
    %c0_1 = arith.constant 0 : index
    %c0_2 = arith.constant 0 : index
    %2 = vector.load %arg2[%c0_1, %c0_2] : memref<3x128xbf16, #tpu.memory_space<vmem>>, vector<3x128xbf16>
    %cst = arith.constant dense<0.000000e+00> : vector<256x128xf32>
    %3 = tpu.matmul %1, %2, %cst {dimension_numbers = #tpu.dot_dimension_numbers<[1], [0], [0], [1], [0, 0, 1, 1], [], []>} : vector<256x3xbf16>, vector<3x128xbf16>, vector<256x128xf32> -> vector<256x128xf32>
    %c0_3 = arith.constant 0 : index
    %c0_4 = arith.constant 0 : index
    %4 = vector.load %arg3[%c0_3, %c0_4] : memref<1x128xf32, #tpu.memory_space<vmem>>, vector<1x128xf32>
    %5 = vector.broadcast %4 : vector<1x128xf32> to vector<256x128xf32>
    %6 = arith.addf %3, %5 : vector<256x128xf32>
    %cst_5 = arith.constant 0.000000e+00 : f32
    %7 = vector.broadcast %cst_5 : f32 to vector<256x128xf32>
    %8 = arith.maximumf %6, %7 : vector<256x128xf32>
    %9 = arith.truncf %8 : vector<256x128xf32> to vector<256x128xbf16>
    %c0_6 = arith.constant 0 : index
    %c0_7 = arith.constant 0 : index
    %10 = vector.load %arg4[%c0_6, %c0_7] : memref<256x128xbf16, #tpu.memory_space<vmem>>, vector<256x128xbf16>
    tpu.vector_store %arg4[%c0_6, %c0_7], %9 {strides = array<i32>} : memref<256x128xbf16, #tpu.memory_space<vmem>>, vector<256x128xbf16>,
    return
  }
  func.func @transform_0(%arg0: i32) -> (i32, i32) {
    %c0_i32 = arith.constant 0 : i32
    %c0_i32_0 = arith.constant 0 : i32
    return %arg0, %c0_i32 : i32, i32
  }
  func.func @transform_1(%arg0: i32) -> (i32, i32) {
    %c0_i32 = arith.constant 0 : i32
    %c0_i32_0 = arith.constant 0 : i32
    %c0_i32_1 = arith.constant 0 : i32
    return %c0_i32, %c0_i32_0 : i32, i32
  }
  func.func @transform_2(%arg0: i32) -> (i32, i32) {
    %c0_i32 = arith.constant 0 : i32
    %c0_i32_0 = arith.constant 0 : i32
    %c0_i32_1 = arith.constant 0 : i32
    return %c0_i32, %c0_i32_0 : i32, i32
  }
  func.func @transform_3(%arg0: i32) -> (i32, i32) {
    %c0_i32 = arith.constant 0 : i32
    %c0_i32_0 = arith.constant 0 : i32
    return %arg0, %c0_i32 : i32, i32
  }
}

</mosaic_0001>

<llo_original>
// kernel: tpu_custom_call.1
$region0: #{tpu_custom_call.1}
  #allocation0 [shape = 'u32[]', space=smem, size = 0x4, offset = 0x4, fixed_abs, tag = 'smem constant byte address 0x4 - core index']
  #allocation1 [shape = 'u32[72,128]{1,0:T(1,128)}', space=vmem, size = 0x9000, scoped, tag = 'internal scratch']
  %s0 = inlined_call_operand.vmem [shape: f32[256,3], index: 0, kind: input, shape index: {}]
  %s1 = inlined_call_operand.vmem [shape: bf16[3,128], index: 1, kind: input, shape index: {}]
  %s2 = inlined_call_operand.vmem [shape: f32[1,128], index: 2, kind: input, shape index: {}]
  %s3 = inlined_call_operand.hbm [shape: bf16[256,128], index: 3, kind: output, shape index: {}]
  %s4 = sld [smem:[#allocation0]]
  $region22: #{tpu_custom_call.1} parent=0
    _
  %s6 = ssub.s32 1, %s4
  %s7 = scalar_select 0, %s6, %s4
  $region1: #{tpu_custom_call.1} parent=0
    #allocation2 [shape = 'u8[65536]{0}', space=vmem, size = 0x10000, scoped, tag = 'output window, operand 0, single buffered']
    #allocation3 [shape = 's32[1]{0}', space=sflag, size = 0x4, scoped, tag = 'scoped memory for tpu_custom_call.1']
    %8 = vsyncpa [#allocation3], 0
    // Predicated region
    $region2: #{tpu_custom_call.1} parent=1 // pred_check
      _
    $region3: #{tpu_custom_call.1} parent=1 // pred_check_branch
      %10 = sbr.rel (0) target = $region5
    $region4: #{tpu_custom_call.1} parent=1 // pred_region
      _
    $region5: #{tpu_custom_call.1} parent=1 // pred_fallthru
      _
    // Predicated region
    $region6: #{tpu_custom_call.1} parent=1 // pred_check
      _
    $region7: #{tpu_custom_call.1} parent=1 // pred_check_branch
      %12 = sbr.rel (0) target = $region9
    $region8: #{tpu_custom_call.1} parent=1 // pred_region
      _
    $region9: #{tpu_custom_call.1} parent=1 // pred_fallthru
      _
    // Predicated region
    $region10: #{tpu_custom_call.1} parent=1 // pred_check
      _
    $region11: #{tpu_custom_call.1} parent=1 // pred_check_branch
      %14 = sbr.rel (0) target = $region13
    $region12: #{tpu_custom_call.1} parent=1 // pred_region
      _
    $region13: #{tpu_custom_call.1} parent=1 // pred_fallthru
      _
    %v16 = vld [vmem:[%s0] sm:$0xff]
    %v17 = vld [vmem:[%s0 + $0x8] sm:$0xff]
    %v18 = vld [vmem:[%s0 + $0x10] sm:$0xff]
    %v19 = vld [vmem:[%s0 + $0x18] sm:$0xff]
    %v20 = vld [vmem:[%s0 + $0x20] sm:$0xff]
    %v21 = vld [vmem:[%s0 + $0x28] sm:$0xff]
    %v22 = vld [vmem:[%s0 + $0x30] sm:$0xff]
    %v23 = vld [vmem:[%s0 + $0x38] sm:$0xff]
    %v24 = vld [vmem:[%s0 + $0x40] sm:$0xff]
    %v25 = vld [vmem:[%s0 + $0x48] sm:$0xff]
    %v26 = vld [vmem:[%s0 + $0x50] sm:$0xff]
    %v27 = vld [vmem:[%s0 + $0x58] sm:$0xff]
    %v28 = vld [vmem:[%s0 + $0x60] sm:$0xff]
    %v29 = vld [vmem:[%s0 + $0x68] sm:$0xff]
    %v30 = vld [vmem:[%s0 + $0x70] sm:$0xff]
    %v31 = vld [vmem:[%s0 + $0x78] sm:$0xff]
    %v32 = vld [vmem:[%s0 + $0x80] sm:$0xff]
    %v33 = vld [vmem:[%s0 + $0x88] sm:$0xff]
    %v34 = vld [vmem:[%s0 + $0x90] sm:$0xff]
    %v35 = vld [vmem:[%s0 + $0x98] sm:$0xff]
    %v36 = vld [vmem:[%s0 + $0xa0] sm:$0xff]
    %v37 = vld [vmem:[%s0 + $0xa8] sm:$0xff]
    %v38 = vld [vmem:[%s0 + $0xb0] sm:$0xff]
    %v39 = vld [vmem:[%s0 + $0xb8] sm:$0xff]
    %v40 = vld [vmem:[%s0 + $0xc0] sm:$0xff]
    %v41 = vld [vmem:[%s0 + $0xc8] sm:$0xff]
    %v42 = vld [vmem:[%s0 + $0xd0] sm:$0xff]
    %v43 = vld [vmem:[%s0 + $0xd8] sm:$0xff]
    %v44 = vld [vmem:[%s0 + $0xe0] sm:$0xff]
    %v45 = vld [vmem:[%s0 + $0xe8] sm:$0xff]
    %v46 = vld [vmem:[%s0 + $0xf0] sm:$0xff]
    %v47 = vld [vmem:[%s0 + $0xf8] sm:$0xff]
    %v48 = vpack.c.bf16 %v17, %v16
    %v49 = vpack.c.bf16 %v19, %v18
    %v50 = vpack.c.bf16 %v21, %v20
    %v51 = vpack.c.bf16 %v23, %v22
    %v52 = vpack.c.bf16 %v25, %v24
    %v53 = vpack.c.bf16 %v27, %v26
    %v54 = vpack.c.bf16 %v29, %v28
    %v55 = vpack.c.bf16 %v31, %v30
    %v56 = vpack.c.bf16 %v33, %v32
    %v57 = vpack.c.bf16 %v35, %v34
    %v58 = vpack.c.bf16 %v37, %v36
    %v59 = vpack.c.bf16 %v39, %v38
    %v60 = vpack.c.bf16 %v41, %v40
    %v61 = vpack.c.bf16 %v43, %v42
    %v62 = vpack.c.bf16 %v45, %v44
    %v63 = vpack.c.bf16 %v47, %v46
    %v64 = vld [vmem:[%s1] sm:$0x3]
    %v65 = vld [vmem:[%s2] sm:$0x1]
    %v67 = vperm.slane %v65, 0
    %vm69 = vcmask 23552
    %v71 = vsel %vm69, %v48, 0
    %v74 = vsel %vm69, %v49, 0
    %v77 = vsel %vm69, %v50, 0
    %v80 = vsel %vm69, %v51, 0
    %v83 = vsel %vm69, %v52, 0
    %v86 = vsel %vm69, %v53, 0
    %v89 = vsel %vm69, %v54, 0
    %v92 = vsel %vm69, %v55, 0
    %v95 = vsel %vm69, %v56, 0
    %v98 = vsel %vm69, %v57, 0
    %v101 = vsel %vm69, %v58, 0
    %v104 = vsel %vm69, %v59, 0
    %v107 = vsel %vm69, %v60, 0
    %v110 = vsel %vm69, %v61, 0
    %v113 = vsel %vm69, %v62, 0
    %v116 = vsel %vm69, %v63, 0
    %vm118 = vcmask 1040384
    %vm119 = vcmask 1041408
    %v120 = vsel %vm118, 4294967295, 65535
    %v121 = vsel %vm119, %v120, 0
    %v123 = vand.u32 %v64, %v121
    %125 = vmatpush.bf16.msra.mxu0 0
    %126 = vmatpush.bf16.msra.mxu0 0
    %127 = vmatpush.bf16.msra.mxu0 0
    %128 = vmatpush.bf16.msra.mxu0 0
    %129 = vmatpush.bf16.msra.mxu0 0
    %130 = vmatpush.bf16.msra.mxu0 0
    %131 = vmatpush.bf16.msra.mxu0 0
    %132 = vmatpush.bf16.msra.mxu0 %v123
    %133 = vmatmul.bf16.gmra.mxu0 %v71
    %v134 = vpop.f32.mrf.mxu0
    %v135 = vadd.f32 %v67, %v134
    %v136 = vpop.f32.mrf.mxu0
    %v137 = vadd.f32 %v67, %v136
    %138 = vmatmul.bf16.gmra.mxu0 %v74
    %v139 = vpop.f32.mrf.mxu0
    %v140 = vadd.f32 %v67, %v139
    %v141 = vpop.f32.mrf.mxu0
    %v142 = vadd.f32 %v67, %v141
    %143 = vmatmul.bf16.gmra.mxu0 %v77
    %v144 = vpop.f32.mrf.mxu0
    %v145 = vadd.f32 %v67, %v144
    %v146 = vpop.f32.mrf.mxu0
    %v147 = vadd.f32 %v67, %v146
    %148 = vmatmul.bf16.gmra.mxu0 %v80
    %v149 = vpop.f32.mrf.mxu0
    %v150 = vadd.f32 %v67, %v149
    %v151 = vpop.f32.mrf.mxu0
    %v152 = vadd.f32 %v67, %v151
    %153 = vmatmul.bf16.gmra.mxu0 %v83
    %v154 = vpop.f32.mrf.mxu0
    %v155 = vadd.f32 %v67, %v154
    %v156 = vpop.f32.mrf.mxu0
    %v157 = vadd.f32 %v67, %v156
    %158 = vmatmul.bf16.gmra.mxu0 %v86
    %v159 = vpop.f32.mrf.mxu0
    %v160 = vadd.f32 %v67, %v159
    %v161 = vpop.f32.mrf.mxu0
    %v162 = vadd.f32 %v67, %v161
    %163 = vmatmul.bf16.gmra.mxu0 %v89
    %v164 = vpop.f32.mrf.mxu0
    %v165 = vadd.f32 %v67, %v164
    %v166 = vpop.f32.mrf.mxu0
    %v167 = vadd.f32 %v67, %v166
    %168 = vmatmul.bf16.gmra.mxu0 %v92
    %v169 = vpop.f32.mrf.mxu0
    %v170 = vadd.f32 %v67, %v169
    %v171 = vpop.f32.mrf.mxu0
    %v172 = vadd.f32 %v67, %v171
    %173 = vmatmul.bf16.gmra.mxu0 %v95
    %v174 = vpop.f32.mrf.mxu0
    %v175 = vadd.f32 %v67, %v174
    %v176 = vpop.f32.mrf.mxu0
    %v177 = vadd.f32 %v67, %v176
    %178 = vmatmul.bf16.gmra.mxu0 %v98
    %v179 = vpop.f32.mrf.mxu0
    %v180 = vadd.f32 %v67, %v179
    %v181 = vpop.f32.mrf.mxu0
    %v182 = vadd.f32 %v67, %v181
    %183 = vmatmul.bf16.gmra.mxu0 %v101
    %v184 = vpop.f32.mrf.mxu0
    %v185 = vadd.f32 %v67, %v184
    %v186 = vpop.f32.mrf.mxu0
    %v187 = vadd.f32 %v67, %v186
    %188 = vmatmul.bf16.gmra.mxu0 %v104
    %v189 = vpop.f32.mrf.mxu0
    %v190 = vadd.f32 %v67, %v189
    %v191 = vpop.f32.mrf.mxu0
    %v192 = vadd.f32 %v67, %v191
    %193 = vmatmul.bf16.gmra.mxu0 %v107
    %v194 = vpop.f32.mrf.mxu0
    %v195 = vadd.f32 %v67, %v194
    %v196 = vpop.f32.mrf.mxu0
    %v197 = vadd.f32 %v67, %v196
    %198 = vmatmul.bf16.gmra.mxu0 %v110
    %v199 = vpop.f32.mrf.mxu0
    %v200 = vadd.f32 %v67, %v199
    %v201 = vpop.f32.mrf.mxu0
    %v202 = vadd.f32 %v67, %v201
    %203 = vmatmul.bf16.gmra.mxu0 %v113
    %v204 = vpop.f32.mrf.mxu0
    %v205 = vadd.f32 %v67, %v204
    %v206 = vpop.f32.mrf.mxu0
    %v207 = vadd.f32 %v67, %v206
    %208 = vmatmul.bf16.gmra.mxu0 %v116
    %v209 = vpop.f32.mrf.mxu0
    %v210 = vadd.f32 %v67, %v209
    %v211 = vpop.f32.mrf.mxu0
    %v212 = vadd.f32 %v67, %v211
    %213 = vdwg.mxu0
    %v214 = vmax.f32 %v135, 0.0
    %v215 = vmax.f32 %v137, 0.0
    %v216 = vmax.f32 %v140, 0.0
    %v217 = vmax.f32 %v142, 0.0
    %v218 = vmax.f32 %v145, 0.0
    %v219 = vmax.f32 %v147, 0.0
    %v220 = vmax.f32 %v150, 0.0
    %v221 = vmax.f32 %v152, 0.0
    %v222 = vmax.f32 %v155, 0.0
    %v223 = vmax.f32 %v157, 0.0
    %v224 = vmax.f32 %v160, 0.0
    %v225 = vmax.f32 %v162, 0.0
    %v226 = vmax.f32 %v165, 0.0
    %v227 = vmax.f32 %v167, 0.0
    %v228 = vmax.f32 %v170, 0.0
    %v229 = vmax.f32 %v172, 0.0
    %v230 = vmax.f32 %v175, 0.0
    %v231 = vmax.f32 %v177, 0.0
    %v232 = vmax.f32 %v180, 0.0
    %v233 = vmax.f32 %v182, 0.0
    %v234 = vmax.f32 %v185, 0.0
    %v235 = vmax.f32 %v187, 0.0
    %v236 = vmax.f32 %v190, 0.0
    %v237 = vmax.f32 %v192, 0.0
    %v238 = vmax.f32 %v195, 0.0
    %v239 = vmax.f32 %v197, 0.0
    %v240 = vmax.f32 %v200, 0.0
    %v241 = vmax.f32 %v202, 0.0
    %v242 = vmax.f32 %v205, 0.0
    %v243 = vmax.f32 %v207, 0.0
    %v244 = vmax.f32 %v210, 0.0
    %v245 = vmax.f32 %v212, 0.0
    %v246 = vpack.c.bf16 %v214, %v214
    %v247 = vpack.c.bf16 %v215, %v215
    %v248 = vpack.c.bf16 %v216, %v216
    %v249 = vpack.c.bf16 %v217, %v217
    %v250 = vpack.c.bf16 %v218, %v218
    %v251 = vpack.c.bf16 %v219, %v219
    %v252 = vpack.c.bf16 %v220, %v220
    %v253 = vpack.c.bf16 %v221, %v221
    %v254 = vpack.c.bf16 %v222, %v222
    %v255 = vpack.c.bf16 %v223, %v223
    %v256 = vpack.c.bf16 %v224, %v224
    %v257 = vpack.c.bf16 %v225, %v225
    %v258 = vpack.c.bf16 %v226, %v226
    %v259 = vpack.c.bf16 %v227, %v227
    %v260 = vpack.c.bf16 %v228, %v228
    %v261 = vpack.c.bf16 %v229, %v229
    %v262 = vpack.c.bf16 %v230, %v230
    %v263 = vpack.c.bf16 %v231, %v231
    %v264 = vpack.c.bf16 %v232, %v232
    %v265 = vpack.c.bf16 %v233, %v233
    %v266 = vpack.c.bf16 %v234, %v234
    %v267 = vpack.c.bf16 %v235, %v235
    %v268 = vpack.c.bf16 %v236, %v236
    %v269 = vpack.c.bf16 %v237, %v237
    %v270 = vpack.c.bf16 %v238, %v238
    %v271 = vpack.c.bf16 %v239, %v239
    %v272 = vpack.c.bf16 %v240, %v240
    %v273 = vpack.c.bf16 %v241, %v241
    %v274 = vpack.c.bf16 %v242, %v242
    %v275 = vpack.c.bf16 %v243, %v243
    %v276 = vpack.c.bf16 %v244, %v244
    %v277 = vpack.c.bf16 %v245, %v245
    %278 = vst [vmem:[#allocation2] sm:$0xf] %v246
    %279 = vst [vmem:[#allocation2 + $0x4] sm:$0xf] %v247
    %280 = vst [vmem:[#allocation2 + $0x8] sm:$0xf] %v248
    %281 = vst [vmem:[#allocation2 + $0xc] sm:$0xf] %v249
    %282 = vst [vmem:[#allocation2 + $0x10] sm:$0xf] %v250
    %283 = vst [vmem:[#allocation2 + $0x14] sm:$0xf] %v251
    %284 = vst [vmem:[#allocation2 + $0x18] sm:$0xf] %v252
    %285 = vst [vmem:[#allocation2 + $0x1c] sm:$0xf] %v253
    %286 = vst [vmem:[#allocation2 + $0x20] sm:$0xf] %v254
    %287 = vst [vmem:[#allocation2 + $0x24] sm:$0xf] %v255
    %288 = vst [vmem:[#allocation2 + $0x28] sm:$0xf] %v256
    %289 = vst [vmem:[#allocation2 + $0x2c] sm:$0xf] %v257
    %290 = vst [vmem:[#allocation2 + $0x30] sm:$0xf] %v258
    %291 = vst [vmem:[#allocation2 + $0x34] sm:$0xf] %v259
    %292 = vst [vmem:[#allocation2 + $0x38] sm:$0xf] %v260
    %293 = vst [vmem:[#allocation2 + $0x3c] sm:$0xf] %v261
    %294 = vst [vmem:[#allocation2 + $0x40] sm:$0xf] %v262
    %295 = vst [vmem:[#allocation2 + $0x44] sm:$0xf] %v263
    %296 = vst [vmem:[#allocation2 + $0x48] sm:$0xf] %v264
    %297 = vst [vmem:[#allocation2 + $0x4c] sm:$0xf] %v265
    %298 = vst [vmem:[#allocation2 + $0x50] sm:$0xf] %v266
    %299 = vst [vmem:[#allocation2 + $0x54] sm:$0xf] %v267
    %300 = vst [vmem:[#allocation2 + $0x58] sm:$0xf] %v268
    %301 = vst [vmem:[#allocation2 + $0x5c] sm:$0xf] %v269
    %302 = vst [vmem:[#allocation2 + $0x60] sm:$0xf] %v270
    %303 = vst [vmem:[#allocation2 + $0x64] sm:$0xf] %v271
    %304 = vst [vmem:[#allocation2 + $0x68] sm:$0xf] %v272
    %305 = vst [vmem:[#allocation2 + $0x6c] sm:$0xf] %v273
    %306 = vst [vmem:[#allocation2 + $0x70] sm:$0xf] %v274
    %307 = vst [vmem:[#allocation2 + $0x74] sm:$0xf] %v275
    %308 = vst [vmem:[#allocation2 + $0x78] sm:$0xf] %v276
    %309 = vst [vmem:[#allocation2 + $0x7c] sm:$0xf] %v277
    // Predicated region
    $region14: #{tpu_custom_call.1} parent=1 // pred_check
      _
    $region15: #{tpu_custom_call.1} parent=1 // pred_check_branch
      %311 = sbr.rel (0) target = $region17
    $region16: #{tpu_custom_call.1} parent=1 // pred_region
      %313 = vsyncadd [#allocation3], 0
      %s314 = sshll.u32 [#allocation2], 4
      %s315 = int_to_ptr.vmem [resolvable:$true] %s314
      %s316 = sshll.u32 %s3, 4
      %s317 = int_to_ptr.hbm [resolvable:$true] %s316
      %322 = dma.vmem_to_hbm [thread:$0]  %s315, 2048, %s317, [#allocation3], 64, 64, 4
    $region17: #{tpu_custom_call.1} parent=1 // pred_fallthru
      _
    // Predicated region
    $region18: #{tpu_custom_call.1} parent=1 // pred_check
      _
    $region19: #{tpu_custom_call.1} parent=1 // pred_check_branch
      %324 = sbr.rel (0) target = $region21
    $region20: #{tpu_custom_call.1} parent=1 // pred_region
      %326 = dma.done [#allocation3], 2048
    $region21: #{tpu_custom_call.1} parent=1 // pred_fallthru
      _
    %327 = vsyncpa [#allocation3], 1

</llo_original>
